<compile_context>
chip_gen: v7x
topology: tpu7x:2x2x1
jax: 0.10.0
libtpu: 0.0.40
codegen_flags: <defaults>
</compile_context>

<pallas_src>
import functools

import jax
import jax.numpy as jnp
from jax.experimental import pallas as pl
from jax.experimental.pallas import tpu as pltpu


def _ceil_to(x, m):
    return ((x + m - 1) // m) * m


def _vmem_budget_bytes():
    """Generation-aware VMEM budget; also used as the explicit scoped-VMEM limit."""
    cap = None
    try:
        info = pltpu.get_tpu_info()
        for attr in ("vmem_capacity_bytes", "vmem_bytes", "vmem_size_bytes"):
            v = getattr(info, attr, None)
            if v:
                cap = int(v)
                break
    except Exception:
        cap = None
    if not cap:
        cap = 64 << 20                       # conservative fallback (v7x per-core size)
    # ~30% headroom for Mosaic internal scratch; clamp to [16 MiB, 100 MiB].
    return int(max(16 << 20, min(0.7 * cap, 100 << 20)))


def _pick_batch_group(B, T, C, n_pad, row_tile, gram_rows,
                      in_bytes, out_bytes, cmp_bytes, budget_bytes):
    """Largest batch group that fits the VMEM budget, keeps >=2 grid steps on the batch
    axis (v7x dual-TC + writeback/compute overlap), is <=8 and divides B."""
    per_b = (2 * T * n_pad * in_bytes                       # double-buffered input block
             + 2 * row_tile * n_pad * out_bytes             # double-buffered output block
             + C * n_pad * cmp_bytes                        # hn scratch slice
             + 4 * (2 * C * n_pad + 3 * gram_rows * n_pad))  # f32 intermediates
    fixed = 2 * 4 * (C * T + C * C) + (1 << 20)             # weights (dbl-buf) + slack
    bg = max(1, (budget_bytes - fixed) // max(per_b, 1))
    bg = min(bg, B, 8)
    if B >= 2:
        bg = min(bg, B // 2)                 # guarantee >=2 grid steps over the batch axis
    bg = max(bg, 1)
    while B % bg:
        bg -= 1
    return bg


def _pam_kernel(s_ref, w1_ref, w2_ref, out_ref, hn_ref, *,
                epsilon, zeros, n_pad, row_tile, single_row_tile, compute_dtype):
    # s_ref:  [T, bg*Np]   (node/lane axis last; batches concatenated along lanes)
    # w1_ref: [C, T]   w2_ref: [C, C]
    # out_ref: [bg, row_tile, Np]
    # hn_ref: VMEM scratch [C, bg*Np] — normalized features, reused across row tiles.
    r = pl.program_id(1)
    bg = out_ref.shape[0]

    @pl.when(r == 0)
    def _features():
        w1 = w1_ref[...].astype(compute_dtype)
        w2 = w2_ref[...].astype(compute_dtype)
        s = s_ref[...].astype(compute_dtype)                         # [T, bg*Np]

        # linear1 + LeakyReLU(0.2):  h^T = W1 @ s  -> [C, bg*Np]   (one wide matmul)
        h = jnp.dot(w1, s, preferred_element_type=jnp.float32)
        h = jnp.maximum(h, 0.2 * h)
        # linear2 + LeakyReLU(0.2)
        h = jnp.dot(w2, h.astype(compute_dtype), preferred_element_type=jnp.float32)
        h = jnp.maximum(h, 0.2 * h)                                   # f32

        # Per-node L2 normalization along the channel axis; Gram of normalized features
        # equals the cosine-similarity matrix (no O(N^2) divide later).
        # (1e-30 clamp keeps padded / all-zero nodes finite; PyTorch would emit NaN.)
        sumsq = jnp.sum(h * h, axis=0, keepdims=True)                 # [1, bg*Np]
        hn_ref[...] = (h * jax.lax.rsqrt(jnp.maximum(sumsq, 1e-30))).astype(compute_dtype)

    row_off = r * row_tile

    for b in range(bg):                        # bg <= 8, static unroll, static lane slices
        lane0 = b * n_pad
        hn_b = hn_ref[:, lane0:lane0 + n_pad]                         # [C, Np]

        if single_row_tile:
            # Small N: full Gram, store only the first row_tile (multiple-of-8) rows.
            pams = jax.lax.dot_general(hn_b, hn_b, (((0,), (0,)), ((), ())),
                                       preferred_element_type=jnp.float32)
            pams_rows = pams[:row_tile, :]                            # [row_tile, Np]
        else:
            # Row-tiled Gram: 128-aligned dynamic lane slice of the resident hn scratch.
            start = pl.multiple_of(lane0 + row_off, 128)
            hn_rows = hn_ref[:, pl.ds(start, row_tile)]               # [C, row_tile]
            pams_rows = jax.lax.dot_general(hn_rows, hn_b, (((0,), (0,)), ((), ())),
                                            preferred_element_type=jnp.float32)

        # Fused epsilon threshold (+ optional diagonal zero), mask recomputed per tile.
        mask = pams_rows <= epsilon
        if zeros:
            rows = jax.lax.broadcasted_iota(jnp.int32, (row_tile, n_pad), 0) + row_off
            cols = jax.lax.broadcasted_iota(jnp.int32, (row_tile, n_pad), 1)
            mask = mask | (rows == cols)
        out_ref[b] = jnp.where(mask, 0.0, pams_rows).astype(out_ref.dtype)


def pam_forward(speed_data, w1, w2, *, zeros=False, epsilon=0.1,
                compute_dtype=jnp.bfloat16, out_dtype=jnp.float32,
                batch_group=None, row_tile=None, trim=True):
    """speed_data: [B, T, N]. w1: [C, T] (torch nn.Linear layout), w2: [C, C].

    compute_dtype: MXU operand dtype (bf16 default; accumulation & elementwise stay f32).
    out_dtype:     dtype of the returned adjacency matrices (bf16 halves HBM writeback).
    trim=False:    return the (B, n_row_pad, n_pad) padded slab (avoids the slice copy).
    """
    B, T, N = speed_data.shape
    C = w1.shape[0]
    assert w1.shape == (C, T) and w2.shape == (C, C)

    n_pad = max(128, _ceil_to(N, 128))                      # lane-dense output columns

    if row_tile is None:
        # Small N: single row tile, rows padded only to a multiple of 8 (sublane align).
        # Large N: 512-row tiles so double-buffered output blocks stay small (v7x VMEM).
        row_tile = _ceil_to(max(N, 8), 8) if n_pad <= 1024 else 512
    else:
        assert row_tile % 128 == 0, "explicit row_tile must be a multiple of 128"
    n_row_pad = _ceil_to(N, row_tile)
    num_row_tiles = n_row_pad // row_tile
    single_row_tile = num_row_tiles == 1
    gram_rows = n_pad if single_row_tile else row_tile

    budget = _vmem_budget_bytes()
    if batch_group is None:
        bg = _pick_batch_group(B, T, C, n_pad, row_tile, gram_rows,
                               in_bytes=4,
                               out_bytes=jnp.dtype(out_dtype).itemsize,
                               cmp_bytes=jnp.dtype(compute_dtype).itemsize,
                               budget_bytes=budget)
    else:
        bg = batch_group
    assert B % bg == 0

    # [B, T, N] -> [T, B, Np] -> [T, B*Np]: node dim on lanes, batches concatenated along
    # lanes so linear1/linear2 become one wide matmul per batch group. (Tiny tensor.)
    x = jnp.transpose(speed_data.astype(jnp.float32), (1, 0, 2))
    if n_pad != N:
        x = jnp.pad(x, ((0, 0), (0, 0), (0, n_pad - N)))
    x = x.reshape(T, B * n_pad)

    kernel = functools.partial(
        _pam_kernel, epsilon=float(epsilon), zeros=bool(zeros), n_pad=n_pad,
        row_tile=row_tile, single_row_tile=single_row_tile, compute_dtype=compute_dtype)

    out = pl.pallas_call(
        kernel,
        out_shape=jax.ShapeDtypeStruct((B, n_row_pad, n_pad), out_dtype),
        grid_spec=pltpu.PrefetchScalarGridSpec(
            num_scalar_prefetch=0,
            grid=(B // bg, num_row_tiles),
            in_specs=[
                pl.BlockSpec((T, bg * n_pad), lambda g, r: (0, g)),
                pl.BlockSpec((C, T), lambda g, r: (0, 0)),
                pl.BlockSpec((C, C), lambda g, r: (0, 0)),
            ],
            out_specs=pl.BlockSpec((bg, row_tile, n_pad), lambda g, r: (g, r, 0)),
            scratch_shapes=[pltpu.VMEM((C, bg * n_pad), compute_dtype)],
        ),
        compiler_params=pltpu.CompilerParams(
            dimension_semantics=("parallel", "arbitrary"),
            vmem_limit_bytes=int(budget)),
    )(x, w1.astype(jnp.float32), w2.astype(jnp.float32))

    if trim and (n_row_pad != N or n_pad != N):
        out = out[:, :N, :N]
    return out


def _xavier_uniform(key, shape):
    fan_in, fan_out = shape[1], shape[0]
    bound = jnp.sqrt(6.0 / (fan_in + fan_out))
    return jax.random.uniform(key, shape, jnp.float32, -bound, bound)


def _ref_pam(speed, w1, w2, zeros, eps):
    """Pure-JAX reference mirroring the PyTorch forward; returns (thresholded, raw)."""
    with jax.default_matmul_precision("highest"):
        x = jnp.transpose(speed, (0, 2, 1))
        h = x @ w1.T
        h = jnp.where(h > 0, h, 0.2 * h)
        h = h @ w2.T
        h = jnp.where(h > 0, h, 0.2 * h)
        g = jnp.einsum("bnc,bmc->bnm", h, h)
        nrm = jnp.linalg.norm(h, axis=2, keepdims=True)
        g = g / (nrm @ jnp.transpose(nrm, (0, 2, 1)))
    if zeros:
        eye = jnp.eye(g.shape[-1], dtype=bool)
        g = jnp.where(eye[None], 0.0, g)
    return jnp.where(g <= eps, 0.0, g), g


def _check(pred, ref_thr, ref_raw, eps, margin, tol):
    # Ignore entries whose raw cosine sits within `margin` of the threshold, since
    # rounding can legitimately flip them across the <= epsilon cutoff.
    far = jnp.abs(ref_raw - eps) > margin
    err = jnp.abs(pred.astype(jnp.float32) - ref_thr)
    return bool(jnp.all(jnp.where(far, err <= tol, True)))


if __name__ == "__main__":
    # Small shapes consistent with the module: batch=2, time_step=8, nodes=16, channels=32.
    B, T, N, C = 2, 8, 16, 32
    key = jax.random.PRNGKey(0)
    k_s, k_w1, k_w2, k_mult, k_s2, k_w1b, k_w2b = jax.random.split(key, 7)

    speed = jax.random.normal(k_s, (B, T, N), jnp.float32)
    w1 = _xavier_uniform(k_w1, (C, T))       # torch nn.Linear layout [out, in], no bias
    w2 = _xavier_uniform(k_w2, (C, C))
    mult = _xavier_uniform(k_mult, (C, C))   # nn.Parameter self.Mult — unused in forward

    ref_thr, ref_raw = _ref_pam(speed, w1, w2, False, 0.1)
    ref_thr_z, _ = _ref_pam(speed, w1, w2, True, 0.1)

    # 1) f32 MXU operands (tight check).
    p1 = pam_forward(speed, w1, w2, zeros=False, epsilon=0.1, compute_dtype=jnp.float32)
    jax.block_until_ready(p1)
    assert p1.shape == (B, N, N)
    assert _check(p1, ref_thr, ref_raw, 0.1, margin=2e-3, tol=5e-4)

    # 2) zeros=True (diagonal-zeroing) path.
    p2 = pam_forward(speed, w1, w2, zeros=True, epsilon=0.1, compute_dtype=jnp.float32)
    jax.block_until_ready(p2)
    assert _check(p2, ref_thr_z, ref_raw, 0.1, margin=2e-3, tol=5e-4)

    # 3) Default bf16 MXU operands + bf16 output writeback (loose, threshold-aware check).
    p3 = pam_forward(speed, w1, w2, zeros=False, epsilon=0.1, out_dtype=jnp.bfloat16)
    jax.block_until_ready(p3)
    assert p3.dtype == jnp.bfloat16 and p3.shape == (B, N, N)
    assert _check(p3, ref_thr, ref_raw, 0.1, margin=3e-2, tol=5e-2)

    # 4) Row-tiled Gram path (forced row_tile=128 to exercise the large-N code path).
    B2, T2, N2 = 4, 12, 256
    speed2 = jax.random.normal(k_s2, (B2, T2, N2), jnp.float32)
    w1b = _xavier_uniform(k_w1b, (C, T2))
    w2b = _xavier_uniform(k_w2b, (C, C))
    ref_thr2, ref_raw2 = _ref_pam(speed2, w1b, w2b, True, 0.1)
    p4 = pam_forward(speed2, w1b, w2b, zeros=True, epsilon=0.1,
                     compute_dtype=jnp.float32, row_tile=128)
    jax.block_until_ready(p4)
    assert p4.shape == (B2, N2, N2)
    assert _check(p4, ref_thr2, ref_raw2, 0.1, margin=2e-3, tol=5e-4)

    print("KERNEL_OK")
</pallas_src>

<mosaic_0001>
module attributes {stable_mosaic.version = 11 : i64} {
  func.func @_pam_kernel(%arg0: i32, %arg1: i32, %arg2: memref<8x128xf32, #tpu.memory_space<vmem>>, %arg3: memref<32x8xf32, #tpu.memory_space<vmem>>, %arg4: memref<32x32xf32, #tpu.memory_space<vmem>>, %arg5: memref<1x16x128xf32, #tpu.memory_space<vmem>>, %arg6: memref<32x128xf32, #tpu.memory_space<vmem>>) attributes {dimension_semantics = [#tpu.dimension_semantics<parallel>, #tpu.dimension_semantics<arbitrary>], iteration_bounds = array<i64: 2, 1>, scalar_prefetch = 0 : i64, scratch_operands = 1 : i64, tpu.core_type = #tpu.core_type<tc>, window_params = [{transform_indices = @transform_0, window_bounds = array<i64: 8, 128>}, {pipeline_mode = #tpu.pipeline_mode<synchronous>, transform_indices = @transform_1, window_bounds = array<i64: 32, 8>}, {pipeline_mode = #tpu.pipeline_mode<synchronous>, transform_indices = @transform_2, window_bounds = array<i64: 32, 32>}, {transform_indices = @transform_3, window_bounds = array<i64: 1, 16, 128>}]} {
    %c0_i32 = arith.constant 0 : i32
    %0 = arith.cmpi eq, %arg1, %c0_i32 : i32
    %1 = arith.extui %0 : i1 to i32
    %c0_i32_0 = arith.constant 0 : i32
    %2 = arith.cmpi ne, %1, %c0_i32_0 : i32
    scf.if %2 {
      %c0_7 = arith.constant 0 : index
      %c0_8 = arith.constant 0 : index
      %13 = vector.load %arg3[%c0_7, %c0_8] : memref<32x8xf32, #tpu.memory_space<vmem>>, vector<32x8xf32>
      %c0_9 = arith.constant 0 : index
      %c0_10 = arith.constant 0 : index
      %14 = vector.load %arg4[%c0_9, %c0_10] : memref<32x32xf32, #tpu.memory_space<vmem>>, vector<32x32xf32>
      %c0_11 = arith.constant 0 : index
      %c0_12 = arith.constant 0 : index
      %15 = vector.load %arg2[%c0_11, %c0_12] : memref<8x128xf32, #tpu.memory_space<vmem>>, vector<8x128xf32>
      %cst_13 = arith.constant dense<0.000000e+00> : vector<32x128xf32>
      %16 = tpu.matmul %13, %15, %cst_13 {dimension_numbers = #tpu.dot_dimension_numbers<[1], [0], [0], [1], [0, 0, 1, 1], [], []>} : vector<32x8xf32>, vector<8x128xf32>, vector<32x128xf32> -> vector<32x128xf32>
      %cst_14 = arith.constant 2.000000e-01 : f32
      %17 = vector.broadcast %cst_14 : f32 to vector<32x128xf32>
      %18 = arith.mulf %17, %16 : vector<32x128xf32>
      %19 = arith.maximumf %16, %18 : vector<32x128xf32>
      %cst_15 = arith.constant dense<0.000000e+00> : vector<32x128xf32>
      %20 = tpu.matmul %14, %19, %cst_15 {dimension_numbers = #tpu.dot_dimension_numbers<[1], [0], [0], [1], [0, 0, 1, 1], [], []>} : vector<32x32xf32>, vector<32x128xf32>, vector<32x128xf32> -> vector<32x128xf32>
      %cst_16 = arith.constant 2.000000e-01 : f32
      %21 = vector.broadcast %cst_16 : f32 to vector<32x128xf32>
      %22 = arith.mulf %21, %20 : vector<32x128xf32>
      %23 = arith.maximumf %20, %22 : vector<32x128xf32>
      %24 = arith.mulf %23, %23 : vector<32x128xf32>
      %cst_17 = arith.constant dense<0.000000e+00> : vector<128xf32>
      %25 = vector.multi_reduction <add>, %24, %cst_17 [0] : vector<32x128xf32> to vector<128xf32>
      %26 = vector.shape_cast %25 : vector<128xf32> to vector<1x128xf32>
      %cst_18 = arith.constant 1.000000e-30 : f32
      %27 = vector.broadcast %cst_18 : f32 to vector<1x128xf32>
      %28 = arith.maximumf %26, %27 : vector<1x128xf32>
      %29 = math.rsqrt %28 : vector<1x128xf32>
      %30 = vector.broadcast %29 : vector<1x128xf32> to vector<32x128xf32>
      %31 = arith.mulf %23, %30 : vector<32x128xf32>
      %c0_19 = arith.constant 0 : index
      %c0_20 = arith.constant 0 : index
      %32 = vector.load %arg6[%c0_19, %c0_20] : memref<32x128xf32, #tpu.memory_space<vmem>>, vector<32x128xf32>
      tpu.vector_store %arg6[%c0_19, %c0_20], %31 {strides = array<i32>} : memref<32x128xf32, #tpu.memory_space<vmem>>, vector<32x128xf32>,
    } else {
    }
    %c0 = arith.constant 0 : index
    %c0_1 = arith.constant 0 : index
    %3 = vector.load %arg6[%c0, %c0_1] : memref<32x128xf32, #tpu.memory_space<vmem>>, vector<32x128xf32>
    %cst = arith.constant dense<0.000000e+00> : vector<128x128xf32>
    %4 = tpu.matmul %3, %3, %cst {dimension_numbers = #tpu.dot_dimension_numbers<[0], [0], [1], [1], [0, 1, 1, 1], [], []>} : vector<32x128xf32>, vector<32x128xf32>, vector<128x128xf32> -> vector<128x128xf32>
    %5 = vector.extract_strided_slice %4 {offsets = [0, 0], sizes = [16, 128], strides = [1, 1]} : vector<128x128xf32> to vector<16x128xf32>
    %cst_2 = arith.constant 1.000000e-01 : f32
    %6 = vector.broadcast %cst_2 : f32 to vector<16x128xf32>
    %7 = arith.cmpf ole, %5, %6 : vector<16x128xf32>
    %cst_3 = arith.constant 0.000000e+00 : f32
    %8 = vector.broadcast %cst_3 : f32 to vector<16x128xf32>
    %9 = arith.select %7, %8, %5 : vector<16x128xi1>, vector<16x128xf32>
    %c0_4 = arith.constant 0 : index
    %c0_5 = arith.constant 0 : index
    %c0_6 = arith.constant 0 : index
    %10 = vector.load %arg5[%c0_4, %c0_5, %c0_6] : memref<1x16x128xf32, #tpu.memory_space<vmem>>, vector<1x16x128xf32>
    %11 = vector.shape_cast %10 : vector<1x16x128xf32> to vector<16x128xf32>
    %12 = vector.shape_cast %9 : vector<16x128xf32> to vector<1x16x128xf32>
    tpu.vector_store %arg5[%c0_4, %c0_5, %c0_6], %12 {strides = array<i32>} : memref<1x16x128xf32, #tpu.memory_space<vmem>>, vector<1x16x128xf32>,
    return
  }
  func.func @transform_0(%arg0: i32, %arg1: i32) -> (i32, i32) {
    %c0_i32 = arith.constant 0 : i32
    %c0_i32_0 = arith.constant 0 : i32
    return %c0_i32, %arg0 : i32, i32
  }
  func.func @transform_1(%arg0: i32, %arg1: i32) -> (i32, i32) {
    %c0_i32 = arith.constant 0 : i32
    %c0_i32_0 = arith.constant 0 : i32
    %c0_i32_1 = arith.constant 0 : i32
    return %c0_i32, %c0_i32_0 : i32, i32
  }
  func.func @transform_2(%arg0: i32, %arg1: i32) -> (i32, i32) {
    %c0_i32 = arith.constant 0 : i32
    %c0_i32_0 = arith.constant 0 : i32
    %c0_i32_1 = arith.constant 0 : i32
    return %c0_i32, %c0_i32_0 : i32, i32
  }
  func.func @transform_3(%arg0: i32, %arg1: i32) -> (i32, i32, i32) {
    %c0_i32 = arith.constant 0 : i32
    %c0_i32_0 = arith.constant 0 : i32
    return %arg0, %arg1, %c0_i32 : i32, i32, i32
  }
}

</mosaic_0001>

<llo_original>
// kernel: tpu_custom_call.1
$region0: #{tpu_custom_call.1}
  #allocation0 [shape = 'u32[]', space=smem, size = 0x4, offset = 0x4, fixed_abs, tag = 'smem constant byte address 0x4 - core index']
  #allocation1 [shape = 'u32[144,128]{1,0:T(1,128)}', space=vmem, size = 0x12000, scoped, tag = 'internal scratch']
  #allocation2 [shape = 'f32[32,128]{1,0:T(8,128)}', space=vmem, size = 0x4000, scoped, tag = 'scratch operand']
  %s0 = inlined_call_operand.hbm [shape: f32[8,256], index: 0, kind: input, shape index: {}]
  %s1 = inlined_call_operand.vmem [shape: f32[32,8], index: 1, kind: input, shape index: {}]
  %s2 = inlined_call_operand.vmem [shape: f32[32,32], index: 2, kind: input, shape index: {}]
  %s3 = inlined_call_operand.hbm [shape: f32[2,16,128], index: 3, kind: output, shape index: {}]
  %s4 = sld [smem:[#allocation0]]
  $region53: #{tpu_custom_call.1} parent=0
    _
  %s6 = ssub.s32 1, %s4
  %s7 = scalar_select 0, %s6, %s4
  $region1: #{tpu_custom_call.1} parent=0
    #allocation3 [shape = 'u8[8192]{0}', space=vmem, size = 0x2000, scoped, tag = 'input window, operand 0']
    #allocation4 [shape = 's32[2]{0}', space=sflag, size = 0x8, scoped, tag = 'scoped memory for tpu_custom_call.1']
    #allocation5 [shape = 's32[2]{0}', space=sflag, size = 0x8, scoped, tag = 'scoped memory for tpu_custom_call.1']
    #allocation6 [shape = 'u8[16384]{0}', space=vmem, size = 0x4000, scoped, tag = 'output window, operand 0']
    %8 = vsyncpa [#allocation4], 0
    %s9 = scalar_lea.sflag [#allocation4], 1
    %10 = vsyncpa %s9, 0
    %11 = vsyncpa [#allocation5], 0
    %s12 = scalar_lea.sflag [#allocation5], 1
    %13 = vsyncpa %s12, 0
    loop: start=0, step=1, limit=4
    $region2: #{tpu_custom_call.1} parent=1 // loop_pre_header
      _
    $region3: #{tpu_custom_call.1} parent=1 // loop_header
      %s15 = sphi 0, %s19
      %p16 = scmp.ge.s32.totalorder %s15, 4
      %s22 = sphi 0, %s34
      %s23 = sphi 0, %s30
      %s24 = sphi 0, %s22
      %s25 = sphi 0, %s23
      %s26 = sphi 0, %s24
      %s27 = sphi 0, %s25
      %s37 = sphi 0, %s39
      %s40 = sphi 0, %s37
      %s41 = sphi 0, %s40
      %s57 = sphi 0, %s41
      %s61 = sphi 0, %s61
      %s63 = sphi 0, %s61
      %s64 = sphi 0, %s63
      %s78 = sphi 0, %s64
      %s82 = sphi 0, %s82
      %s84 = sphi 0, %s82
      %s85 = sphi 0, %s84
      %s99 = sphi 0, %s85
      %s107 = sphi 0, %s109
      %s110 = sphi 0, %s107
      %s111 = sphi 0, %s110
      %s127 = sphi 0, %s111
    $region4: #{tpu_custom_call.1} parent=1 // loop_header_branch
      %18 = sbr.rel (%p16) target = $region8
    $region5: #{tpu_custom_call.1} parent=1 // loop_body
      %s20 = ssub.s32 %s15, 1
      %s21 = ssub.s32 %s15, 2
      %s28 = sadd.s32 1, %s23
      %p29 = scmp.ge.s32.totalorder %s28, 1
      %s30 = scalar_select %p29, 0, %s28
      %s31 = sadd.s32 1, %s22
      %s32 = scalar_select %p29, %s31, %s22
      %p33 = scmp.ge.s32.totalorder %s32, 2
      %s34 = scalar_select %p33, 0, %s32
      %s35 = ssub.s32 %s22, %s34
      %p36 = scmp.eq.s32.totalorder %s35, 0
      %s38 = sadd.s32 %s37, 1
      %s39 = scalar_select %p36, %s37, %s38
      %p42 = pneg %p36
      %p43 = scmp.eq.s32.totalorder %s15, 1
      %p44 = por %p42, %p43
      %p45 = scmp.ne.s32.totalorder %s37, %s40
      %p46 = scmp.eq.s32.totalorder %s15, 0
      %p47 = por %p45, %p46
      %p48 = scmp.ne.s32.totalorder %s37, %s40
      %p49 = scmp.eq.s32.totalorder %s20, 1
      %p50 = por %p48, %p49
      %p51 = scmp.ne.s32.totalorder %s40, %s41
      %p52 = scmp.eq.s32.totalorder %s20, 0
      %p53 = por %p51, %p52
      %p54 = scmp.ne.s32.totalorder %s40, %s41
      %p55 = scmp.eq.s32.totalorder %s21, 1
      %p56 = por %p54, %p55
      %p58 = scmp.ne.s32.totalorder %s41, %s57
      %p59 = scmp.eq.s32.totalorder %s21, 0
      %p60 = por %p58, %p59
      %s62 = sadd.s32 %s61, 1
      %p65 = scmp.eq.s32.totalorder %s15, 1
      %p66 = scmp.ne.s32.totalorder %s61, %s63
      %p67 = scmp.eq.s32.totalorder %s15, 0
      %p68 = por %p66, %p67
      %p69 = scmp.ne.s32.totalorder %s61, %s63
      %p70 = scmp.eq.s32.totalorder %s20, 1
      %p71 = por %p69, %p70
      %p72 = scmp.ne.s32.totalorder %s63, %s64
      %p73 = scmp.eq.s32.totalorder %s20, 0
      %p74 = por %p72, %p73
      %p75 = scmp.ne.s32.totalorder %s63, %s64
      %p76 = scmp.eq.s32.totalorder %s21, 1
      %p77 = por %p75, %p76
      %p79 = scmp.ne.s32.totalorder %s64, %s78
      %p80 = scmp.eq.s32.totalorder %s21, 0
      %p81 = por %p79, %p80
      %s83 = sadd.s32 %s82, 1
      %p86 = scmp.eq.s32.totalorder %s15, 1
      %p87 = scmp.ne.s32.totalorder %s82, %s84
      %p88 = scmp.eq.s32.totalorder %s15, 0
      %p89 = por %p87, %p88
      %p90 = scmp.ne.s32.totalorder %s82, %s84
      %p91 = scmp.eq.s32.totalorder %s20, 1
      %p92 = por %p90, %p91
      %p93 = scmp.ne.s32.totalorder %s84, %s85
      %p94 = scmp.eq.s32.totalorder %s20, 0
      %p95 = por %p93, %p94
      %p96 = scmp.ne.s32.totalorder %s84, %s85
      %p97 = scmp.eq.s32.totalorder %s21, 1
      %p98 = por %p96, %p97
      %p100 = scmp.ne.s32.totalorder %s85, %s99
      %p101 = scmp.eq.s32.totalorder %s21, 0
      %p102 = por %p100, %p101
      %s103 = ssub.s32 %s22, %s34
      %s104 = ssub.s32 %s23, %s30
      %s105 = sor.u32 %s103, %s104
      %p106 = scmp.eq.s32.totalorder %s105, 0
      %s108 = sadd.s32 %s107, 1
      %s109 = scalar_select %p106, %s107, %s108
      %p112 = pneg %p106
      %p113 = scmp.eq.s32.totalorder %s15, 1
      %p114 = por %p112, %p113
      %p115 = scmp.ne.s32.totalorder %s107, %s110
      %p116 = scmp.eq.s32.totalorder %s15, 0
      %p117 = por %p115, %p116
      %p118 = scmp.ne.s32.totalorder %s107, %s110
      %p119 = scmp.eq.s32.totalorder %s20, 1
      %p120 = por %p118, %p119
      %p121 = scmp.ne.s32.totalorder %s110, %s111
      %p122 = scmp.eq.s32.totalorder %s20, 0
      %p123 = por %p121, %p122
      %p124 = scmp.ne.s32.totalorder %s110, %s111
      %p125 = scmp.eq.s32.totalorder %s21, 1
      %p126 = por %p124, %p125
      %p128 = scmp.ne.s32.totalorder %s111, %s127
      %p129 = scmp.eq.s32.totalorder %s21, 0
      %p130 = por %p128, %p129
      %p131 = scmp.le.s32.totalorder 1, %s15
      %p132 = scmp.lt.s32.totalorder %s15, 3
      %p133 = pnand %p131, %p132
      %p134 = pneg %p133
      // Predicated region
      $region9: #{tpu_custom_call.1} parent=5 // pred_check
        _
      $region10: #{tpu_custom_call.1} parent=5 // pred_check_branch
        %136 = sbr.rel (%p133) target = $region12
      $region11: #{tpu_custom_call.1} parent=5 // pred_region
        %s137 = ssub.s32 %s15, 1
        // Predicated region
        $region13: #{tpu_custom_call.1} parent=11 // pred_check
          %p138 = pneg %p74
        $region14: #{tpu_custom_call.1} parent=11 // pred_check_branch
          %140 = sbr.rel (%p138) target = $region16
        $region15: #{tpu_custom_call.1} parent=11 // pred_region
          _
        $region16: #{tpu_custom_call.1} parent=11 // pred_fallthru
          _
        // Predicated region
        $region17: #{tpu_custom_call.1} parent=11 // pred_check
          %p141 = pneg %p95
        $region18: #{tpu_custom_call.1} parent=11 // pred_check_branch
          %143 = sbr.rel (%p141) target = $region20
        $region19: #{tpu_custom_call.1} parent=11 // pred_region
          _
        $region20: #{tpu_custom_call.1} parent=11 // pred_fallthru
          _
      $region12: #{tpu_custom_call.1} parent=5 // pred_fallthru
        _
      %p144 = scmp.lt.s32.totalorder %s15, 2
      // Predicated region
      $region21: #{tpu_custom_call.1} parent=5 // pred_check
        %p145 = pneg %p144
      $region22: #{tpu_custom_call.1} parent=5 // pred_check_branch
        %147 = sbr.rel (%p145) target = $region24
      $region23: #{tpu_custom_call.1} parent=5 // pred_region
        // Predicated region
        $region25: #{tpu_custom_call.1} parent=23 // pred_check
          %p148 = pneg %p47
        $region26: #{tpu_custom_call.1} parent=23 // pred_check_branch
          %150 = sbr.rel (%p148) target = $region28
        $region27: #{tpu_custom_call.1} parent=23 // pred_region
          %s151 = sand.u32 %s37, 1
          %s152 = scalar_lea.sflag [#allocation4], %s151
          %s153 = sand.u32 %s37, 1
          %s154 = smul.addr %s153, 8
          %s155 = scalar_lea.vmem [#allocation3], %s154
          %s157 = ssub.s32 128, 128
          %158 = vsyncadd %s152, %s157
          %s159 = smul.addr %s22, 128
          %s160 = scalar_lea.hbm %s0, %s159
          %s162 = sshll.u32 %s155, 4
          %s163 = int_to_ptr.vmem [resolvable:$true] %s162
          %165 = dma.hbm_to_vmem [thread:$0]  %s160, 128, %s163, %s152
        $region28: #{tpu_custom_call.1} parent=23 // pred_fallthru
          _
      $region24: #{tpu_custom_call.1} parent=5 // pred_fallthru
        _
      %p166 = scmp.le.s32.totalorder 1, %s15
      %p167 = scmp.lt.s32.totalorder %s15, 3
      %p168 = pnand %p166, %p167
      %p169 = pneg %p168
      // Predicated region
      $region29: #{tpu_custom_call.1} parent=5 // pred_check
        _
      $region30: #{tpu_custom_call.1} parent=5 // pred_check_branch
        %171 = sbr.rel (%p168) target = $region32
      $region31: #{tpu_custom_call.1} parent=5 // pred_region
        %s172 = ssub.s32 %s15, 1
        %s173 = sand.u32 %s40, 1
        %s174 = scalar_lea.sflag [#allocation4], %s173
        %s175 = sand.u32 %s40, 1
        %s176 = smul.addr %s175, 8
        %s177 = scalar_lea.vmem [#allocation3], %s176
        // Predicated region
        $region33: #{tpu_custom_call.1} parent=31 // pred_check
          %p178 = pneg %p53
        $region34: #{tpu_custom_call.1} parent=31 // pred_check_branch
          %180 = sbr.rel (%p178) target = $region36
        $region35: #{tpu_custom_call.1} parent=31 // pred_region
          %181 = dma.done %s174, 128
        $region36: #{tpu_custom_call.1} parent=31 // pred_fallthru
          _
        %s182 = sand.u32 %s40, 1
        %s183 = scalar_lea.sflag [#allocation4], %s182
        %s184 = sand.u32 %s40, 1
        %s185 = smul.addr %s184, 8
        %s186 = scalar_lea.vmem [#allocation3], %s185
        %p187 = pneg %p53
        %p188 = pneg %p50
        %p189 = pneg %p74
        %p190 = pneg %p71
        %p191 = pneg %p95
        %p192 = pneg %p92
        %p193 = pneg %p123
        %p194 = pneg %p120
        %s195 = sand.u32 %s110, 1
        %s196 = scalar_lea.sflag [#allocation5], %s195
        %s197 = sand.u32 %s110, 1
        %s198 = smul.addr %s197, 16
        %s199 = scalar_lea.vmem [#allocation6], %s198
        %s200 = smul.u32 2, %s25
        %p201 = scmp.eq.s32.totalorder %s25, 0
        // Predicated region
        $region37: #{tpu_custom_call.1} parent=31 // pred_check
          %p202 = pneg %p201
        $region38: #{tpu_custom_call.1} parent=31 // pred_check_branch
          %204 = sbr.rel (%p202) target = $region40
        $region39: #{tpu_custom_call.1} parent=31 // pred_region
          %v205 = vld [vmem:[%s1] sm:$0xff]
          %v206 = vld [vmem:[%s1 + $0x8] sm:$0xff]
          %v207 = vld [vmem:[%s1 + $0x10] sm:$0xff]
          %v208 = vld [vmem:[%s1 + $0x18] sm:$0xff]
          %v209 = vld [vmem:[%s2] sm:$0xff]
          %v210 = vld [vmem:[%s2 + $0x8] sm:$0xff]
          %v211 = vld [vmem:[%s2 + $0x10] sm:$0xff]
          %v212 = vld [vmem:[%s2 + $0x18] sm:$0xff]
          %v213 = vld [vmem:[%s177] sm:$0xff]
          %vm214 = vcmask 64512
          %v216 = vsel %vm214, %v205, 0
          %v219 = vsel %vm214, %v206, 0
          %v222 = vsel %vm214, %v207, 0
          %v225 = vsel %vm214, %v208, 0
          %227 = vmatprep.subr.mxu0 0.0
          %228 = vmatpush1.msra.mxu0 %v213
          %229 = vmatprep.subr.mxu0 0.0
          %230 = vmatpush1.msra.mxu0 0.0
          %231 = vmatprep.subr.mxu0 0.0
          %232 = vmatpush1.msra.mxu0 0.0
          %233 = vmatprep.subr.mxu0 0.0
          %234 = vmatpush1.msra.mxu0 0.0
          %235 = vmatprep.subr.mxu0 0.0
          %236 = vmatpush1.msra.mxu0 0.0
          %237 = vmatprep.subr.mxu0 0.0
          %238 = vmatpush1.msra.mxu0 0.0
          %239 = vmatprep.subr.mxu0 0.0
          %240 = vmatpush1.msra.mxu0 0.0
          %241 = vmatprep.subr.mxu0 0.0
          %242 = vmatpush1.msra.mxu0 0.0
          %243 = vmatprep.subr.mxu0 0.0
          %244 = vmatpush1.msra.mxu0 0.0
          %245 = vmatprep.subr.mxu0 0.0
          %246 = vmatpush1.msra.mxu0 0.0
          %247 = vmatprep.subr.mxu0 0.0
          %248 = vmatpush1.msra.mxu0 0.0
          %249 = vmatprep.subr.mxu0 0.0
          %250 = vmatpush1.msra.mxu0 0.0
          %251 = vmatprep.subr.mxu0 0.0
          %252 = vmatpush1.msra.mxu0 0.0
          %253 = vmatprep.subr.mxu0 0.0
          %254 = vmatpush1.msra.mxu0 0.0
          %255 = vmatprep.subr.mxu0 0.0
          %256 = vmatpush1.msra.mxu0 0.0
          %257 = vmatprep.subr.mxu0 0.0
          %258 = vmatpush1.msra.mxu0 0.0
          %259 = vmatprep.subr.mxu0 0.0
          %260 = vmatpush1.msra.mxu0 0.0
          %261 = vmatprep.subr.mxu0 0.0
          %262 = vmatpush1.msra.mxu0 0.0
          %263 = vmatprep.subr.mxu0 0.0
          %264 = vmatpush1.msra.mxu0 0.0
          %265 = vmatprep.subr.mxu0 0.0
          %266 = vmatpush1.msra.mxu0 0.0
          %267 = vmatprep.subr.mxu0 0.0
          %268 = vmatpush1.msra.mxu0 0.0
          %269 = vmatprep.subr.mxu0 0.0
          %270 = vmatpush1.msra.mxu0 0.0
          %271 = vmatprep.subr.mxu0 0.0
          %272 = vmatpush1.msra.mxu0 0.0
          %273 = vmatprep.subr.mxu0 0.0
          %274 = vmatpush1.msra.mxu0 0.0
          %275 = vmatprep.subr.mxu0 0.0
          %276 = vmatpush1.msra.mxu0 0.0
          %277 = vmatprep.subr.mxu0 0.0
          %278 = vmatpush1.msra.mxu0 0.0
          %279 = vmatprep.subr.mxu0 0.0
          %280 = vmatpush1.msra.mxu0 0.0
          %281 = vmatprep.subr.mxu0 0.0
          %282 = vmatpush1.msra.mxu0 0.0
          %283 = vmatprep.subr.mxu0 0.0
          %284 = vmatpush1.msra.mxu0 0.0
          %285 = vmatprep.subr.mxu0 0.0
          %286 = vmatpush1.msra.mxu0 0.0
          %287 = vmatprep.subr.mxu0 0.0
          %288 = vmatpush1.msra.mxu0 0.0
          %289 = vmatprep.subr.mxu0 0.0
          %290 = vmatpush1.msra.mxu0 0.0
          %291 = vmatprep.mubr.f32.mxu0 0.0
          %292 = vmatmul.mubr.f32.gmra.mrb[0].mxu0 %v216
          %v293 = vpop.f32.mrb[0].mxu0
          %v294 = vadd.f32 0.0, %v293
          %v295 = vpop.f32.mrb[0].mxu0
          %296 = vmatprep.mubr.f32.mxu0 0.0
          %297 = vmatmul.mubr.f32.gmra.mrb[0].mxu0 %v219
          %v298 = vpop.f32.mrb[0].mxu0
          %v299 = vadd.f32 0.0, %v298
          %v300 = vpop.f32.mrb[0].mxu0
          %301 = vmatprep.mubr.f32.mxu0 0.0
          %302 = vmatmul.mubr.f32.gmra.mrb[0].mxu0 %v222
          %v303 = vpop.f32.mrb[0].mxu0
          %v304 = vadd.f32 0.0, %v303
          %v305 = vpop.f32.mrb[0].mxu0
          %306 = vmatprep.mubr.f32.mxu0 0.0
          %307 = vmatmul.mubr.f32.gmra.mrb[0].mxu0 %v225
          %v308 = vpop.f32.mrb[0].mxu0
          %v309 = vadd.f32 0.0, %v308
          %v310 = vpop.f32.mrb[0].mxu0
          %311 = vdwg.mxu0
          %v312 = vmul.f32 %v294, 0.2
          %v313 = vmul.f32 %v299, 0.2
          %v314 = vmul.f32 %v304, 0.2
          %v315 = vmul.f32 %v309, 0.2
          %v316 = vmax.f32 %v294, %v312
          %v317 = vmax.f32 %v299, %v313
          %v318 = vmax.f32 %v304, %v314
          %v319 = vmax.f32 %v309, %v315
          %vm320 = vcmask 261120
          %v322 = vsel %vm320, %v209, 0
          %v325 = vsel %vm320, %v210, 0
          %v328 = vsel %vm320, %v211, 0
          %v331 = vsel %vm320, %v212, 0
          %333 = vmatprep.subr.mxu0 0.0
          %334 = vmatpush1.msra.mxu0 %v316
          %335 = vmatprep.subr.mxu0 0.0
          %336 = vmatpush1.msra.mxu0 %v317
          %337 = vmatprep.subr.mxu0 0.0
          %338 = vmatpush1.msra.mxu0 %v318
          %339 = vmatprep.subr.mxu0 0.0
          %340 = vmatpush1.msra.mxu0 %v319
          %341 = vmatprep.subr.mxu0 0.0
          %342 = vmatpush1.msra.mxu0 0.0
          %343 = vmatprep.subr.mxu0 0.0
          %344 = vmatpush1.msra.mxu0 0.0
          %345 = vmatprep.subr.mxu0 0.0
          %346 = vmatpush1.msra.mxu0 0.0
          %347 = vmatprep.subr.mxu0 0.0
          %348 = vmatpush1.msra.mxu0 0.0
          %349 = vmatprep.subr.mxu0 0.0
          %350 = vmatpush1.msra.mxu0 0.0
          %351 = vmatprep.subr.mxu0 0.0
          %352 = vmatpush1.msra.mxu0 0.0
          %353 = vmatprep.subr.mxu0 0.0
          %354 = vmatpush1.msra.mxu0 0.0
          %355 = vmatprep.subr.mxu0 0.0
          %356 = vmatpush1.msra.mxu0 0.0
          %357 = vmatprep.subr.mxu0 0.0
          %358 = vmatpush1.msra.mxu0 0.0
          %359 = vmatprep.subr.mxu0 0.0
          %360 = vmatpush1.msra.mxu0 0.0
          %361 = vmatprep.subr.mxu0 0.0
          %362 = vmatpush1.msra.mxu0 0.0
          %363 = vmatprep.subr.mxu0 0.0
          %364 = vmatpush1.msra.mxu0 0.0
          %365 = vmatprep.subr.mxu0 0.0
          %366 = vmatpush1.msra.mxu0 0.0
          %367 = vmatprep.subr.mxu0 0.0
          %368 = vmatpush1.msra.mxu0 0.0
          %369 = vmatprep.subr.mxu0 0.0
          %370 = vmatpush1.msra.mxu0 0.0
          %371 = vmatprep.subr.mxu0 0.0
          %372 = vmatpush1.msra.mxu0 0.0
          %373 = vmatprep.subr.mxu0 0.0
          %374 = vmatpush1.msra.mxu0 0.0
          %375 = vmatprep.subr.mxu0 0.0
          %376 = vmatpush1.msra.mxu0 0.0
          %377 = vmatprep.subr.mxu0 0.0
          %378 = vmatpush1.msra.mxu0 0.0
          %379 = vmatprep.subr.mxu0 0.0
          %380 = vmatpush1.msra.mxu0 0.0
          %381 = vmatprep.subr.mxu0 0.0
          %382 = vmatpush1.msra.mxu0 0.0
          %383 = vmatprep.subr.mxu0 0.0
          %384 = vmatpush1.msra.mxu0 0.0
          %385 = vmatprep.subr.mxu0 0.0
          %386 = vmatpush1.msra.mxu0 0.0
          %387 = vmatprep.subr.mxu0 0.0
          %388 = vmatpush1.msra.mxu0 0.0
          %389 = vmatprep.subr.mxu0 0.0
          %390 = vmatpush1.msra.mxu0 0.0
          %391 = vmatprep.subr.mxu0 0.0
          %392 = vmatpush1.msra.mxu0 0.0
          %393 = vmatprep.subr.mxu0 0.0
          %394 = vmatpush1.msra.mxu0 0.0
          %395 = vmatprep.subr.mxu0 0.0
          %396 = vmatpush1.msra.mxu0 0.0
          %397 = vmatprep.mubr.f32.mxu0 0.0
          %398 = vmatmul.mubr.f32.gmra.mrb[0].mxu0 %v322
          %v399 = vpop.f32.mrb[0].mxu0
          %v400 = vadd.f32 0.0, %v399
          %v401 = vpop.f32.mrb[0].mxu0
          %402 = vmatprep.mubr.f32.mxu0 0.0
          %403 = vmatmul.mubr.f32.gmra.mrb[0].mxu0 %v325
          %v404 = vpop.f32.mrb[0].mxu0
          %v405 = vadd.f32 0.0, %v404
          %v406 = vpop.f32.mrb[0].mxu0
          %407 = vmatprep.mubr.f32.mxu0 0.0
          %408 = vmatmul.mubr.f32.gmra.mrb[0].mxu0 %v328
          %v409 = vpop.f32.mrb[0].mxu0
          %v410 = vadd.f32 0.0, %v409
          %v411 = vpop.f32.mrb[0].mxu0
          %412 = vmatprep.mubr.f32.mxu0 0.0
          %413 = vmatmul.mubr.f32.gmra.mrb[0].mxu0 %v331
          %v414 = vpop.f32.mrb[0].mxu0
          %v415 = vadd.f32 0.0, %v414
          %v416 = vpop.f32.mrb[0].mxu0
          %417 = vdwg.mxu0
          %v418 = vmul.f32 %v400, 0.2
          %v419 = vmul.f32 %v405, 0.2
          %v420 = vmul.f32 %v410, 0.2
          %v421 = vmul.f32 %v415, 0.2
          %v422 = vmax.f32 %v400, %v418
          %v423 = vmax.f32 %v405, %v419
          %v424 = vmax.f32 %v410, %v420
          %v425 = vmax.f32 %v415, %v421
          %v426 = vmul.f32 %v422, %v422
          %v427 = vmul.f32 %v423, %v423
          %v428 = vmul.f32 %v424, %v424
          %v429 = vmul.f32 %v425, %v425
          %v430 = vadd.f32 %v426, %v427
          %v431 = vadd.f32 %v430, %v428
          %v432 = vadd.f32 %v431, %v429
          %v433 = vrot.slane %v432, 4
          %v434 = vadd.f32 %v432, %v433
          %v435 = vrot.slane %v434, 2
          %v436 = vadd.f32 %v434, %v435
          %v437 = vrot.slane %v436, 1
          %v438 = vadd.f32 %v436, %v437
          %v439 = vmax.f32 %v438, 1e-30
          %v440 = vrsqrt.pop %v439
          %v441 = vmul.f32 %v422, %v440
          %v442 = vmul.f32 %v423, %v440
          %v443 = vmul.f32 %v424, %v440
          %v444 = vmul.f32 %v425, %v440
          %445 = vst [vmem:[#allocation2] sm:$0xff] %v441
          %446 = vst [vmem:[#allocation2 + $0x8] sm:$0xff] %v442
          %447 = vst [vmem:[#allocation2 + $0x10] sm:$0xff] %v443
          %448 = vst [vmem:[#allocation2 + $0x18] sm:$0xff] %v444
        $region40: #{tpu_custom_call.1} parent=31 // pred_fallthru
          _
        %v449 = vld [vmem:[#allocation2] sm:$0xff]
        %v450 = vld [vmem:[#allocation2 + $0x8] sm:$0xff]
        %v451 = vld [vmem:[#allocation2 + $0x10] sm:$0xff]
        %v452 = vld [vmem:[#allocation2 + $0x18] sm:$0xff]
        %453 = vxpose.xlu0.b32.start [1/16] %v449, 128
        %454 = vxpose.xlu0.b32.cont [2/16] %v450, 128
        %455 = vxpose.xlu0.b32.cont [3/16] %v451, 128
        %456 = vxpose.xlu0.b32.cont [4/16] %v452, 128
        %457 = vxpose.xlu0.b32.cont [5/16] 0.0, 128
        %458 = vxpose.xlu0.b32.cont [6/16] 0.0, 128
        %459 = vxpose.xlu0.b32.cont [7/16] 0.0, 128
        %460 = vxpose.xlu0.b32.cont [8/16] 0.0, 128
        %461 = vxpose.xlu0.b32.cont [9/16] 0.0, 128
        %462 = vxpose.xlu0.b32.cont [10/16] 0.0, 128
        %463 = vxpose.xlu0.b32.cont [11/16] 0.0, 128
        %464 = vxpose.xlu0.b32.cont [12/16] 0.0, 128
        %465 = vxpose.xlu0.b32.cont [13/16] 0.0, 128
        %466 = vxpose.xlu0.b32.cont [14/16] 0.0, 128
        %467 = vxpose.xlu0.b32.cont [15/16] 0.0, 128
        %468 = vxpose.xlu0.b32.end [16/16] 0.0, 128
        %v469 = vpop.trf.xlu0
        %v470 = vpop.trf.xlu0
        %v471 = vpop.trf.xlu0
        %v472 = vpop.trf.xlu0
        %v473 = vpop.trf.xlu0
        %v474 = vpop.trf.xlu0
        %v475 = vpop.trf.xlu0
        %v476 = vpop.trf.xlu0
        %v477 = vpop.trf.xlu0
        %v478 = vpop.trf.xlu0
        %v479 = vpop.trf.xlu0
        %v480 = vpop.trf.xlu0
        %v481 = vpop.trf.xlu0
        %v482 = vpop.trf.xlu0
        %v483 = vpop.trf.xlu0
        %v484 = vpop.trf.xlu0
        %vm485 = vcmask 261120
        %v487 = vsel %vm485, %v469, 0
        %v490 = vsel %vm485, %v470, 0
        %v493 = vsel %vm485, %v471, 0
        %v496 = vsel %vm485, %v472, 0
        %v499 = vsel %vm485, %v473, 0
        %v502 = vsel %vm485, %v474, 0
        %v505 = vsel %vm485, %v475, 0
        %v508 = vsel %vm485, %v476, 0
        %v511 = vsel %vm485, %v477, 0
        %v514 = vsel %vm485, %v478, 0
        %v517 = vsel %vm485, %v479, 0
        %v520 = vsel %vm485, %v480, 0
        %v523 = vsel %vm485, %v481, 0
        %v526 = vsel %vm485, %v482, 0
        %v529 = vsel %vm485, %v483, 0
        %v532 = vsel %vm485, %v484, 0
        %534 = vmatprep.subr.mxu0 0.0
        %535 = vmatpush1.msra.mxu0 %v449
        %536 = vmatprep.subr.mxu0 0.0
        %537 = vmatpush1.msra.mxu0 %v450
        %538 = vmatprep.subr.mxu0 0.0
        %539 = vmatpush1.msra.mxu0 %v451
        %540 = vmatprep.subr.mxu0 0.0
        %541 = vmatpush1.msra.mxu0 %v452
        %542 = vmatprep.subr.mxu0 0.0
        %543 = vmatpush1.msra.mxu0 0.0
        %544 = vmatprep.subr.mxu0 0.0
        %545 = vmatpush1.msra.mxu0 0.0
        %546 = vmatprep.subr.mxu0 0.0
        %547 = vmatpush1.msra.mxu0 0.0
        %548 = vmatprep.subr.mxu0 0.0
        %549 = vmatpush1.msra.mxu0 0.0
        %550 = vmatprep.subr.mxu0 0.0
        %551 = vmatpush1.msra.mxu0 0.0
        %552 = vmatprep.subr.mxu0 0.0
        %553 = vmatpush1.msra.mxu0 0.0
        %554 = vmatprep.subr.mxu0 0.0
        %555 = vmatpush1.msra.mxu0 0.0
        %556 = vmatprep.subr.mxu0 0.0
        %557 = vmatpush1.msra.mxu0 0.0
        %558 = vmatprep.subr.mxu0 0.0
        %559 = vmatpush1.msra.mxu0 0.0
        %560 = vmatprep.subr.mxu0 0.0
        %561 = vmatpush1.msra.mxu0 0.0
        %562 = vmatprep.subr.mxu0 0.0
        %563 = vmatpush1.msra.mxu0 0.0
        %564 = vmatprep.subr.mxu0 0.0
        %565 = vmatpush1.msra.mxu0 0.0
        %566 = vmatprep.subr.mxu0 0.0
        %567 = vmatpush1.msra.mxu0 0.0
        %568 = vmatprep.subr.mxu0 0.0
        %569 = vmatpush1.msra.mxu0 0.0
        %570 = vmatprep.subr.mxu0 0.0
        %571 = vmatpush1.msra.mxu0 0.0
        %572 = vmatprep.subr.mxu0 0.0
        %573 = vmatpush1.msra.mxu0 0.0
        %574 = vmatprep.subr.mxu0 0.0
        %575 = vmatpush1.msra.mxu0 0.0
        %576 = vmatprep.subr.mxu0 0.0
        %577 = vmatpush1.msra.mxu0 0.0
        %578 = vmatprep.subr.mxu0 0.0
        %579 = vmatpush1.msra.mxu0 0.0
        %580 = vmatprep.subr.mxu0 0.0
        %581 = vmatpush1.msra.mxu0 0.0
        %582 = vmatprep.subr.mxu0 0.0
        %583 = vmatpush1.msra.mxu0 0.0
        %584 = vmatprep.subr.mxu0 0.0
        %585 = vmatpush1.msra.mxu0 0.0
        %586 = vmatprep.subr.mxu0 0.0
        %587 = vmatpush1.msra.mxu0 0.0
        %588 = vmatprep.subr.mxu0 0.0
        %589 = vmatpush1.msra.mxu0 0.0
        %590 = vmatprep.subr.mxu0 0.0
        %591 = vmatpush1.msra.mxu0 0.0
        %592 = vmatprep.subr.mxu0 0.0
        %593 = vmatpush1.msra.mxu0 0.0
        %594 = vmatprep.subr.mxu0 0.0
        %595 = vmatpush1.msra.mxu0 0.0
        %596 = vmatprep.subr.mxu0 0.0
        %597 = vmatpush1.msra.mxu0 0.0
        %598 = vmatprep.mubr.f32.mxu0 0.0
        %599 = vmatmul.mubr.f32.gmra.mrb[0].mxu0 %v487
        %v600 = vpop.f32.mrb[0].mxu0
        %v601 = vadd.f32 0.0, %v600
        %v602 = vpop.f32.mrb[0].mxu0
        %603 = vmatprep.mubr.f32.mxu0 0.0
        %604 = vmatmul.mubr.f32.gmra.mrb[0].mxu0 %v490
        %v605 = vpop.f32.mrb[0].mxu0
        %v606 = vadd.f32 0.0, %v605
        %v607 = vpop.f32.mrb[0].mxu0
        %608 = vmatprep.mubr.f32.mxu0 0.0
        %609 = vmatmul.mubr.f32.gmra.mrb[0].mxu0 %v493
        %v610 = vpop.f32.mrb[0].mxu0
        %v611 = vpop.f32.mrb[0].mxu0
        %612 = vmatprep.mubr.f32.mxu0 0.0
        %613 = vmatmul.mubr.f32.gmra.mrb[0].mxu0 %v496
        %v614 = vpop.f32.mrb[0].mxu0
        %v615 = vpop.f32.mrb[0].mxu0
        %616 = vmatprep.mubr.f32.mxu0 0.0
        %617 = vmatmul.mubr.f32.gmra.mrb[0].mxu0 %v499
        %v618 = vpop.f32.mrb[0].mxu0
        %v619 = vpop.f32.mrb[0].mxu0
        %620 = vmatprep.mubr.f32.mxu0 0.0
        %621 = vmatmul.mubr.f32.gmra.mrb[0].mxu0 %v502
        %v622 = vpop.f32.mrb[0].mxu0
        %v623 = vpop.f32.mrb[0].mxu0
        %624 = vmatprep.mubr.f32.mxu0 0.0
        %625 = vmatmul.mubr.f32.gmra.mrb[0].mxu0 %v505
        %v626 = vpop.f32.mrb[0].mxu0
        %v627 = vpop.f32.mrb[0].mxu0
        %628 = vmatprep.mubr.f32.mxu0 0.0
        %629 = vmatmul.mubr.f32.gmra.mrb[0].mxu0 %v508
        %v630 = vpop.f32.mrb[0].mxu0
        %v631 = vpop.f32.mrb[0].mxu0
        %632 = vmatprep.mubr.f32.mxu0 0.0
        %633 = vmatmul.mubr.f32.gmra.mrb[0].mxu0 %v511
        %v634 = vpop.f32.mrb[0].mxu0
        %v635 = vpop.f32.mrb[0].mxu0
        %636 = vmatprep.mubr.f32.mxu0 0.0
        %637 = vmatmul.mubr.f32.gmra.mrb[0].mxu0 %v514
        %v638 = vpop.f32.mrb[0].mxu0
        %v639 = vpop.f32.mrb[0].mxu0
        %640 = vmatprep.mubr.f32.mxu0 0.0
        %641 = vmatmul.mubr.f32.gmra.mrb[0].mxu0 %v517
        %v642 = vpop.f32.mrb[0].mxu0
        %v643 = vpop.f32.mrb[0].mxu0
        %644 = vmatprep.mubr.f32.mxu0 0.0
        %645 = vmatmul.mubr.f32.gmra.mrb[0].mxu0 %v520
        %v646 = vpop.f32.mrb[0].mxu0
        %v647 = vpop.f32.mrb[0].mxu0
        %648 = vmatprep.mubr.f32.mxu0 0.0
        %649 = vmatmul.mubr.f32.gmra.mrb[0].mxu0 %v523
        %v650 = vpop.f32.mrb[0].mxu0
        %v651 = vpop.f32.mrb[0].mxu0
        %652 = vmatprep.mubr.f32.mxu0 0.0
        %653 = vmatmul.mubr.f32.gmra.mrb[0].mxu0 %v526
        %v654 = vpop.f32.mrb[0].mxu0
        %v655 = vpop.f32.mrb[0].mxu0
        %656 = vmatprep.mubr.f32.mxu0 0.0
        %657 = vmatmul.mubr.f32.gmra.mrb[0].mxu0 %v529
        %v658 = vpop.f32.mrb[0].mxu0
        %v659 = vpop.f32.mrb[0].mxu0
        %660 = vmatprep.mubr.f32.mxu0 0.0
        %661 = vmatmul.mubr.f32.gmra.mrb[0].mxu0 %v532
        %v662 = vpop.f32.mrb[0].mxu0
        %v663 = vpop.f32.mrb[0].mxu0
        %664 = vdwg.mxu0
        %vm665 = vcmp.le.f32.partialorder %v601, 0.1
        %vm666 = vcmp.le.f32.partialorder %v606, 0.1
        %v667 = vsel %vm665, 0.0, %v601
        %v668 = vsel %vm666, 0.0, %v606
        %669 = vst [vmem:[%s199] sm:$0xff] %v667
        %670 = vst [vmem:[%s199 + $0x8] sm:$0xff] %v668
        %s671 = sand.u32 %s110, 1
        %s672 = scalar_lea.sflag [#allocation5], %s671
        %s673 = sand.u32 %s110, 1
        %s674 = smul.addr %s673, 16
        %s675 = scalar_lea.vmem [#allocation6], %s674
        // Predicated region
        $region41: #{tpu_custom_call.1} parent=31 // pred_check
          %p676 = pneg %p120
        $region42: #{tpu_custom_call.1} parent=31 // pred_check_branch
          %678 = sbr.rel (%p676) target = $region44
        $region43: #{tpu_custom_call.1} parent=31 // pred_region
          %s679 = smul.u32 2, %s25
          %s681 = ssub.s32 256, 256
          %682 = vsyncadd %s672, %s681
          %s683 = smul.addr %s24, 2
          %s684 = sadd.s32 %s679, %s683
          %s685 = smul.addr %s684, 128
          %s686 = scalar_lea.hbm %s3, %s685
          %s687 = sshll.u32 %s675, 4
          %s688 = int_to_ptr.vmem [resolvable:$true] %s687
          %693 = dma.vmem_to_hbm [thread:$0]  %s688, 256, %s686, %s672, 128, 128, 8
        $region44: #{tpu_custom_call.1} parent=31 // pred_fallthru
          _
      $region32: #{tpu_custom_call.1} parent=5 // pred_fallthru
        _
      %p694 = scmp.le.s32.totalorder 2, %s15
      // Predicated region
      $region45: #{tpu_custom_call.1} parent=5 // pred_check
        %p695 = pneg %p694
      $region46: #{tpu_custom_call.1} parent=5 // pred_check_branch
        %697 = sbr.rel (%p695) target = $region48
      $region47: #{tpu_custom_call.1} parent=5 // pred_region
        %s698 = ssub.s32 %s15, 2
        // Predicated region
        $region49: #{tpu_custom_call.1} parent=47 // pred_check
          %p699 = pneg %p126
        $region50: #{tpu_custom_call.1} parent=47 // pred_check_branch
          %701 = sbr.rel (%p699) target = $region52
        $region51: #{tpu_custom_call.1} parent=47 // pred_region
          %s702 = sand.u32 %s111, 1
          %s703 = scalar_lea.sflag [#allocation5], %s702
          %s704 = sand.u32 %s111, 1
          %s705 = smul.addr %s704, 16
          %s706 = scalar_lea.vmem [#allocation6], %s705
          %707 = dma.done %s703, 256
        $region52: #{tpu_custom_call.1} parent=47 // pred_fallthru
          _
      $region48: #{tpu_custom_call.1} parent=5 // pred_fallthru
        _
    $region6: #{tpu_custom_call.1} parent=1 // loop_footer
      %s19 = sadd.s32 1, %s15
    $region7: #{tpu_custom_call.1} parent=1 // loop_footer_branch
      %14 = sbr.rel target = $region3
    $region8: #{tpu_custom_call.1} parent=1 // loop_exit
      _
    %708 = vsyncpa [#allocation4], 1
    %s709 = scalar_lea.sflag [#allocation4], 1
    %710 = vsyncpa %s709, 1
    %711 = vsyncpa [#allocation5], 1
    %s712 = scalar_lea.sflag [#allocation5], 1
    %713 = vsyncpa %s712, 1

</llo_original>
